<compile_context>
chip_gen: v7x
topology: tpu7x:2x2x1
jax: 0.10.0
libtpu: 0.0.40
codegen_flags: <defaults>
</compile_context>

<pallas_src>
import jax
import jax.numpy as jnp
from jax.experimental import pallas as pl
from jax.experimental.pallas import tpu as pltpu

_LANE = 128
_SUBLANE = 8


def _round_up(x, m):
    return (x + m - 1) // m * m


def mmdl_kernel(x0_ref, x1_ref, we0_ref, we1_ref, be_ref, whr_ref, bhr_ref,
                out_ref):
    """Fused MMDL forward for one batch tile.

    x0_ref  : [TB, D0]        modality-0 raw input (caller dtype)
    x1_ref  : [TB, D1]        modality-1 raw input (caller dtype)
    we0_ref : [D0, F2]        w0 in columns [:H], zeros in [H:F2]   (compute dtype)
    we1_ref : [D1, F2]        zeros in [:H], w1 in columns [H:F2]   (compute dtype)
    be_ref  : [1, F2]         concat(b0, b1), f32
    whr_ref : [F2, OUTp]      [ I_F2 | wh | wr | 0-pad ]            (compute dtype)
    bhr_ref : [1, OUTp]       [ 0    | bh | br | 0-pad ], f32
    out_ref : [TB, OUTp]      [ fuse | logit | rec | 0-pad ]
    """
    cd = we0_ref.dtype
    # Both encoders: two MXU pushes into one f32 accumulator.  Column placement
    # in we0/we1 makes the accumulator directly equal fuse = enc0 | enc1.
    fuse = jnp.maximum(
        jnp.dot(x0_ref[...].astype(cd), we0_ref[...],
                preferred_element_type=jnp.float32)
        + jnp.dot(x1_ref[...].astype(cd), we1_ref[...],
                  preferred_element_type=jnp.float32)
        + be_ref[...],
        0.0)
    # Identity | head | refiner in one MXU push -> fuse | logit | rec | 0-pad.
    # Single full-width (multiple-of-128 lanes) unmasked store.
    out = (jnp.dot(fuse.astype(cd), whr_ref[...],
                   preferred_element_type=jnp.float32)
           + bhr_ref[...])
    out_ref[...] = out.astype(out_ref.dtype)


def mmdl_forward(x0, x1, params, *, tile_b=1024, compute_dtype=jnp.bfloat16,
                 out_dtype=jnp.float32, min_grid_steps=4,
                 vmem_budget_bytes=40 * 1024 * 1024, vmem_limit_bytes=None):
    B, D0 = x0.shape
    B1, D1 = x1.shape
    assert B1 == B, "modalities must share the batch dimension"
    H = params["w0"].shape[1]
    C = params["wh"].shape[1]
    F2 = 2 * H
    DR = D0 + D1
    OUT = F2 + C + DR
    OUTp = _round_up(OUT, _LANE)          # padded width of the single output slab
    cd = compute_dtype

    # ---- pack weights (tiny, wrapper-side) ----
    # Encoder weights with column placement so enc0 | enc1 comes out fused.
    we0 = jnp.zeros((D0, F2), cd).at[:, :H].set(params["w0"].astype(cd))
    we1 = jnp.zeros((D1, F2), cd).at[:, H:F2].set(params["w1"].astype(cd))
    be = jnp.zeros((1, F2), jnp.float32)
    be = be.at[:, :H].set(params["b0"]).at[:, H:F2].set(params["b1"])

    # Identity-augmented head+refiner: [ I | wh | wr | 0-pad ].
    whr = jnp.zeros((F2, OUTp), cd)
    whr = whr.at[:, :F2].set(jnp.eye(F2, dtype=cd))
    whr = whr.at[:, F2:F2 + C].set(params["wh"].astype(cd))
    whr = whr.at[:, F2 + C:F2 + C + DR].set(params["wr"].astype(cd))
    bhr = jnp.zeros((1, OUTp), jnp.float32)
    bhr = bhr.at[:, F2:F2 + C].set(params["bh"])
    bhr = bhr.at[:, F2 + C:F2 + C + DR].set(params["br"])

    # ---- tile sizing: VMEM budget + minimum grid-step count ----
    cd_b = jnp.dtype(cd).itemsize
    bytes_x = D0 * jnp.dtype(x0.dtype).itemsize + D1 * jnp.dtype(x1.dtype).itemsize
    bytes_out = OUTp * jnp.dtype(out_dtype).itemsize
    stream_bytes_per_row = 2 * (bytes_x + bytes_out)        # double-buffered streams
    weight_bytes = 2 * ((D0 + D1) * F2 * cd_b + F2 * OUTp * cd_b
                        + (F2 + OUTp) * 4)                  # (default double-buffered)

    Bp8 = _round_up(B, _SUBLANE)
    # cap tb so the grid has >= min_grid_steps steps (pipelining + v7x megacore)
    tb_steps = _round_up(pl.cdiv(Bp8, max(min_grid_steps, 1)), _SUBLANE)
    avail = max(vmem_budget_bytes - weight_bytes, _SUBLANE * stream_bytes_per_row)
    tb_vmem = max(_SUBLANE, avail // stream_bytes_per_row // _SUBLANE * _SUBLANE)
    tb = max(_SUBLANE, min(tile_b, tb_steps, tb_vmem, Bp8))

    Bp = _round_up(B, tb)
    if Bp != B:
        x0 = jnp.pad(x0, ((0, Bp - B), (0, 0)))
        x1 = jnp.pad(x1, ((0, Bp - B), (0, 0)))

    if vmem_limit_bytes is None:
        # follow the budget; 56 MiB ceiling stays inside v7x's 64 MiB physical VMEM
        vmem_limit_bytes = min(vmem_budget_bytes + (8 << 20), 56 << 20)

    grid = (Bp // tb,)

    def row(width):
        return pl.BlockSpec((tb, width), lambda i: (i, 0))

    def full(shape):
        return pl.BlockSpec(shape, lambda i, _n=len(shape): (0,) * _n)

    out_p = pl.pallas_call(
        mmdl_kernel,
        out_shape=jax.ShapeDtypeStruct((Bp, OUTp), out_dtype),
        grid=grid,
        in_specs=[row(D0),              # x0 tile streams over the batch grid
                  row(D1),              # x1 tile streams over the batch grid
                  full(we0.shape),      # weights: constant index -> VMEM resident
                  full(we1.shape),
                  full(be.shape),
                  full(whr.shape),
                  full(bhr.shape)],
        out_specs=row(OUTp),            # single lane-dense output slab
        compiler_params=pltpu.CompilerParams(
            dimension_semantics=("parallel",),
            vmem_limit_bytes=int(vmem_limit_bytes)),
    )(x0, x1, we0, we1, be, whr, bhr)

    out_p = out_p[:B]

    # Cheap wrapper-side slices of the single lane-dense output.
    fuse = out_p[:, :F2]
    enc0 = out_p[:, :H]
    enc1 = out_p[:, H:F2]
    logit = out_p[:, F2:F2 + C]
    rec = out_p[:, F2 + C:F2 + C + DR]
    # rec_features slicing per MMDL.forward (has_padding=False, 2 modalities).
    rec_features = [rec[:, :D0], rec[:, D0:D0 + D1]]

    return [logit, fuse, [enc0, enc1], rec_features]


def init_params(key, D0, D1, H, C):
    ks = jax.random.split(key, 8)
    s = 0.05
    return {
        "w0": s * jax.random.normal(ks[0], (D0, H), jnp.float32),
        "b0": s * jax.random.normal(ks[1], (1, H), jnp.float32),
        "w1": s * jax.random.normal(ks[2], (D1, H), jnp.float32),
        "b1": s * jax.random.normal(ks[3], (1, H), jnp.float32),
        "wh": s * jax.random.normal(ks[4], (2 * H, C), jnp.float32),
        "bh": s * jax.random.normal(ks[5], (1, C), jnp.float32),
        "wr": s * jax.random.normal(ks[6], (2 * H, D0 + D1), jnp.float32),
        "br": s * jax.random.normal(ks[7], (1, D0 + D1), jnp.float32),
    }


if __name__ == "__main__":
    B, D0, D1, H, C = 8, 16, 32, 32, 8

    key = jax.random.PRNGKey(0)
    kx0, kx1, kp = jax.random.split(key, 3)
    x0 = jax.random.normal(kx0, (B, D0), jnp.float32)
    x1 = jax.random.normal(kx1, (B, D1), jnp.float32)
    params = init_params(kp, D0, D1, H, C)

    # plain-JAX reference (f32)
    e0 = jnp.maximum(x0 @ params["w0"] + params["b0"], 0.0)
    e1 = jnp.maximum(x1 @ params["w1"] + params["b1"], 0.0)
    fuse_ref = jnp.concatenate([e0, e1], axis=-1)
    logit_ref = fuse_ref @ params["wh"] + params["bh"]
    rec_ref = fuse_ref @ params["wr"] + params["br"]

    # 1) default fast path: bf16 MXU operands, f32 accumulation (loose check).
    logit_b, fuse_b, outs_b, rec_b = mmdl_forward(x0, x1, params)
    jax.block_until_ready((logit_b, fuse_b, outs_b, rec_b))
    assert jnp.allclose(logit_b, logit_ref, atol=3e-2)
    assert jnp.allclose(fuse_b, fuse_ref, atol=3e-2)

    # 2) f32 compute path: tight check against the reference.
    logit, fuse, outs, rec_features = mmdl_forward(
        x0, x1, params, compute_dtype=jnp.float32)
    jax.block_until_ready((logit, fuse, outs, rec_features))
    assert jnp.allclose(logit, logit_ref, atol=1e-4)
    assert jnp.allclose(fuse, fuse_ref, atol=1e-4)
    assert jnp.allclose(outs[0], e0, atol=1e-4)
    assert jnp.allclose(outs[1], e1, atol=1e-4)
    assert jnp.allclose(rec_features[0], rec_ref[:, :D0], atol=1e-4)
    assert jnp.allclose(rec_features[1], rec_ref[:, D0:D0 + D1], atol=1e-4)

    print("KERNEL_OK")
</pallas_src>

<mosaic_0001>
module attributes {stable_mosaic.version = 11 : i64} {
  func.func @mmdl_kernel(%arg0: i32, %arg1: memref<8x16xf32, #tpu.memory_space<vmem>>, %arg2: memref<8x32xf32, #tpu.memory_space<vmem>>, %arg3: memref<16x64xbf16, #tpu.memory_space<vmem>>, %arg4: memref<32x64xbf16, #tpu.memory_space<vmem>>, %arg5: memref<1x64xf32, #tpu.memory_space<vmem>>, %arg6: memref<64x128xbf16, #tpu.memory_space<vmem>>, %arg7: memref<1x128xf32, #tpu.memory_space<vmem>>, %arg8: memref<8x128xf32, #tpu.memory_space<vmem>>) attributes {dimension_semantics = [#tpu.dimension_semantics<parallel>], iteration_bounds = array<i64: 1>, scalar_prefetch = 0 : i64, scratch_operands = 0 : i64, tpu.core_type = #tpu.core_type<tc>, window_params = [{transform_indices = @transform_0, window_bounds = array<i64: 8, 16>}, {transform_indices = @transform_1, window_bounds = array<i64: 8, 32>}, {pipeline_mode = #tpu.pipeline_mode<synchronous>, transform_indices = @transform_2, window_bounds = array<i64: 16, 64>}, {pipeline_mode = #tpu.pipeline_mode<synchronous>, transform_indices = @transform_3, window_bounds = array<i64: 32, 64>}, {pipeline_mode = #tpu.pipeline_mode<synchronous>, transform_indices = @transform_4, window_bounds = array<i64: 1, 64>}, {pipeline_mode = #tpu.pipeline_mode<synchronous>, transform_indices = @transform_5, window_bounds = array<i64: 64, 128>}, {pipeline_mode = #tpu.pipeline_mode<synchronous>, transform_indices = @transform_6, window_bounds = array<i64: 1, 128>}, {transform_indices = @transform_7, window_bounds = array<i64: 8, 128>}]} {
    %c0 = arith.constant 0 : index
    %c0_0 = arith.constant 0 : index
    %0 = vector.load %arg1[%c0, %c0_0] : memref<8x16xf32, #tpu.memory_space<vmem>>, vector<8x16xf32>
    %1 = arith.truncf %0 : vector<8x16xf32> to vector<8x16xbf16>
    %c0_1 = arith.constant 0 : index
    %c0_2 = arith.constant 0 : index
    %2 = vector.load %arg3[%c0_1, %c0_2] : memref<16x64xbf16, #tpu.memory_space<vmem>>, vector<16x64xbf16>
    %cst = arith.constant dense<0.000000e+00> : vector<8x64xf32>
    %3 = tpu.matmul %1, %2, %cst {dimension_numbers = #tpu.dot_dimension_numbers<[1], [0], [0], [1], [0, 0, 1, 1], [], []>} : vector<8x16xbf16>, vector<16x64xbf16>, vector<8x64xf32> -> vector<8x64xf32>
    %c0_3 = arith.constant 0 : index
    %c0_4 = arith.constant 0 : index
    %4 = vector.load %arg2[%c0_3, %c0_4] : memref<8x32xf32, #tpu.memory_space<vmem>>, vector<8x32xf32>
    %5 = arith.truncf %4 : vector<8x32xf32> to vector<8x32xbf16>
    %c0_5 = arith.constant 0 : index
    %c0_6 = arith.constant 0 : index
    %6 = vector.load %arg4[%c0_5, %c0_6] : memref<32x64xbf16, #tpu.memory_space<vmem>>, vector<32x64xbf16>
    %cst_7 = arith.constant dense<0.000000e+00> : vector<8x64xf32>
    %7 = tpu.matmul %5, %6, %cst_7 {dimension_numbers = #tpu.dot_dimension_numbers<[1], [0], [0], [1], [0, 0, 1, 1], [], []>} : vector<8x32xbf16>, vector<32x64xbf16>, vector<8x64xf32> -> vector<8x64xf32>
    %8 = arith.addf %3, %7 : vector<8x64xf32>
    %c0_8 = arith.constant 0 : index
    %c0_9 = arith.constant 0 : index
    %9 = vector.load %arg5[%c0_8, %c0_9] : memref<1x64xf32, #tpu.memory_space<vmem>>, vector<1x64xf32>
    %10 = vector.broadcast %9 : vector<1x64xf32> to vector<8x64xf32>
    %11 = arith.addf %8, %10 : vector<8x64xf32>
    %cst_10 = arith.constant 0.000000e+00 : f32
    %12 = vector.broadcast %cst_10 : f32 to vector<8x64xf32>
    %13 = arith.maximumf %11, %12 : vector<8x64xf32>
    %14 = arith.truncf %13 : vector<8x64xf32> to vector<8x64xbf16>
    %c0_11 = arith.constant 0 : index
    %c0_12 = arith.constant 0 : index
    %15 = vector.load %arg6[%c0_11, %c0_12] : memref<64x128xbf16, #tpu.memory_space<vmem>>, vector<64x128xbf16>
    %cst_13 = arith.constant dense<0.000000e+00> : vector<8x128xf32>
    %16 = tpu.matmul %14, %15, %cst_13 {dimension_numbers = #tpu.dot_dimension_numbers<[1], [0], [0], [1], [0, 0, 1, 1], [], []>} : vector<8x64xbf16>, vector<64x128xbf16>, vector<8x128xf32> -> vector<8x128xf32>
    %c0_14 = arith.constant 0 : index
    %c0_15 = arith.constant 0 : index
    %17 = vector.load %arg7[%c0_14, %c0_15] : memref<1x128xf32, #tpu.memory_space<vmem>>, vector<1x128xf32>
    %18 = vector.broadcast %17 : vector<1x128xf32> to vector<8x128xf32>
    %19 = arith.addf %16, %18 : vector<8x128xf32>
    %c0_16 = arith.constant 0 : index
    %c0_17 = arith.constant 0 : index
    %20 = vector.load %arg8[%c0_16, %c0_17] : memref<8x128xf32, #tpu.memory_space<vmem>>, vector<8x128xf32>
    tpu.vector_store %arg8[%c0_16, %c0_17], %19 {strides = array<i32>} : memref<8x128xf32, #tpu.memory_space<vmem>>, vector<8x128xf32>,
    return
  }
  func.func @transform_0(%arg0: i32) -> (i32, i32) {
    %c0_i32 = arith.constant 0 : i32
    %c0_i32_0 = arith.constant 0 : i32
    return %arg0, %c0_i32 : i32, i32
  }
  func.func @transform_1(%arg0: i32) -> (i32, i32) {
    %c0_i32 = arith.constant 0 : i32
    %c0_i32_0 = arith.constant 0 : i32
    return %arg0, %c0_i32 : i32, i32
  }
  func.func @transform_2(%arg0: i32) -> (i32, i32) {
    %c0_i32 = arith.constant 0 : i32
    %c0_i32_0 = arith.constant 0 : i32
    %c0_i32_1 = arith.constant 0 : i32
    return %c0_i32, %c0_i32_0 : i32, i32
  }
  func.func @transform_3(%arg0: i32) -> (i32, i32) {
    %c0_i32 = arith.constant 0 : i32
    %c0_i32_0 = arith.constant 0 : i32
    %c0_i32_1 = arith.constant 0 : i32
    return %c0_i32, %c0_i32_0 : i32, i32
  }
  func.func @transform_4(%arg0: i32) -> (i32, i32) {
    %c0_i32 = arith.constant 0 : i32
    %c0_i32_0 = arith.constant 0 : i32
    %c0_i32_1 = arith.constant 0 : i32
    return %c0_i32, %c0_i32_0 : i32, i32
  }
  func.func @transform_5(%arg0: i32) -> (i32, i32) {
    %c0_i32 = arith.constant 0 : i32
    %c0_i32_0 = arith.constant 0 : i32
    %c0_i32_1 = arith.constant 0 : i32
    return %c0_i32, %c0_i32_0 : i32, i32
  }
  func.func @transform_6(%arg0: i32) -> (i32, i32) {
    %c0_i32 = arith.constant 0 : i32
    %c0_i32_0 = arith.constant 0 : i32
    %c0_i32_1 = arith.constant 0 : i32
    return %c0_i32, %c0_i32_0 : i32, i32
  }
  func.func @transform_7(%arg0: i32) -> (i32, i32) {
    %c0_i32 = arith.constant 0 : i32
    %c0_i32_0 = arith.constant 0 : i32
    return %arg0, %c0_i32 : i32, i32
  }
}

</mosaic_0001>

<llo_original>
// kernel: tpu_custom_call.1
$region0: #{tpu_custom_call.1}
  #allocation0 [shape = 'u32[]', space=smem, size = 0x4, offset = 0x4, fixed_abs, tag = 'smem constant byte address 0x4 - core index']
  #allocation1 [shape = 'u32[144,128]{1,0:T(1,128)}', space=vmem, size = 0x12000, scoped, tag = 'internal scratch']
  %s0 = inlined_call_operand.hbm [shape: f32[8,16], index: 0, kind: input, shape index: {}]
  %s1 = inlined_call_operand.hbm [shape: f32[8,32], index: 1, kind: input, shape index: {}]
  %s2 = inlined_call_operand.hbm [shape: bf16[16,64], index: 2, kind: input, shape index: {}]
  %s3 = inlined_call_operand.hbm [shape: bf16[32,64], index: 3, kind: input, shape index: {}]
  %s4 = inlined_call_operand.vmem [shape: f32[1,64], index: 4, kind: input, shape index: {}]
  %s5 = inlined_call_operand.hbm [shape: bf16[64,128], index: 5, kind: input, shape index: {}]
  %s6 = inlined_call_operand.vmem [shape: f32[1,128], index: 6, kind: input, shape index: {}]
  %s7 = inlined_call_operand.hbm [shape: f32[8,128], index: 7, kind: output, shape index: {}]
  %s8 = sld [smem:[#allocation0]]
  $region58: #{tpu_custom_call.1} parent=0
    _
  %s10 = ssub.s32 1, %s8
  %s11 = scalar_select 0, %s10, %s8
  $region1: #{tpu_custom_call.1} parent=0
    #allocation2 [shape = 'u8[4096]{0}', space=vmem, size = 0x1000, scoped, tag = 'input window, operand 0, single buffered']
    #allocation3 [shape = 's32[1]{0}', space=sflag, size = 0x4, scoped, tag = 'scoped memory for tpu_custom_call.1']
    #allocation4 [shape = 's32[1]{0}', space=sflag, size = 0x4, scoped, tag = 'scoped memory for tpu_custom_call.1']
    #allocation5 [shape = 'u8[4096]{0}', space=vmem, size = 0x1000, scoped, tag = 'input window, operand 1, single buffered']
    #allocation6 [shape = 's32[1]{0}', space=sflag, size = 0x4, scoped, tag = 'scoped memory for tpu_custom_call.1']
    #allocation7 [shape = 'u8[4096]{0}', space=vmem, size = 0x1000, scoped, tag = 'input window, operand 2, single buffered']
    #allocation8 [shape = 'u8[8192]{0}', space=vmem, size = 0x2000, scoped, tag = 'input window, operand 3, single buffered']
    #allocation9 [shape = 's32[1]{0}', space=sflag, size = 0x4, scoped, tag = 'scoped memory for tpu_custom_call.1']
    #allocation10 [shape = 'u8[16384]{0}', space=vmem, size = 0x4000, scoped, tag = 'input window, operand 5, single buffered']
    #allocation11 [shape = 'u8[4096]{0}', space=vmem, size = 0x1000, scoped, tag = 'output window, operand 0, single buffered']
    %12 = vsyncpa [#allocation3], 0
    %13 = vsyncpa [#allocation6], 0
    %14 = vsyncpa [#allocation9], 0
    %15 = vsyncpa [#allocation4], 0
    // Predicated region
    $region2: #{tpu_custom_call.1} parent=1 // pred_check
      _
    $region3: #{tpu_custom_call.1} parent=1 // pred_check_branch
      %17 = sbr.rel (0) target = $region5
    $region4: #{tpu_custom_call.1} parent=1 // pred_region
      %s19 = ssub.s32 128, 128
      %20 = vsyncadd [#allocation3], %s19
      %s22 = sshll.u32 [#allocation2], 4
      %s23 = int_to_ptr.vmem [resolvable:$true] %s22
      %25 = dma.hbm_to_vmem [thread:$0]  %s0, 128, %s23, [#allocation3]
    $region5: #{tpu_custom_call.1} parent=1 // pred_fallthru
      _
    // Predicated region
    $region6: #{tpu_custom_call.1} parent=1 // pred_check
      _
    $region7: #{tpu_custom_call.1} parent=1 // pred_check_branch
      %27 = sbr.rel (0) target = $region9
    $region8: #{tpu_custom_call.1} parent=1 // pred_region
      %s29 = ssub.s32 128, 128
      %30 = vsyncadd [#allocation6], %s29
      %s32 = sshll.u32 [#allocation5], 4
      %s33 = int_to_ptr.vmem [resolvable:$true] %s32
      %35 = dma.hbm_to_vmem [thread:$0]  %s1, 128, %s33, [#allocation6]
    $region9: #{tpu_custom_call.1} parent=1 // pred_fallthru
      _
    // Predicated region
    $region10: #{tpu_custom_call.1} parent=1 // pred_check
      _
    $region11: #{tpu_custom_call.1} parent=1 // pred_check_branch
      %37 = sbr.rel (0) target = $region13
    $region12: #{tpu_custom_call.1} parent=1 // pred_region
      %s39 = ssub.s32 128, 128
      %40 = vsyncadd [#allocation6], %s39
      %s41 = sshll.u32 [#allocation7], 4
      %s42 = int_to_ptr.vmem [resolvable:$true] %s41
      %47 = dma.hbm_to_vmem [thread:$0]  %s2, 128, %s42, [#allocation6], 64, 64, 4
    $region13: #{tpu_custom_call.1} parent=1 // pred_fallthru
      _
    // Predicated region
    $region14: #{tpu_custom_call.1} parent=1 // pred_check
      _
    $region15: #{tpu_custom_call.1} parent=1 // pred_check_branch
      %49 = sbr.rel (0) target = $region17
    $region16: #{tpu_custom_call.1} parent=1 // pred_region
      %s51 = ssub.s32 256, 256
      %52 = vsyncadd [#allocation9], %s51
      %s53 = sshll.u32 [#allocation8], 4
      %s54 = int_to_ptr.vmem [resolvable:$true] %s53
      %59 = dma.hbm_to_vmem [thread:$0]  %s3, 256, %s54, [#allocation9], 64, 64, 4
    $region17: #{tpu_custom_call.1} parent=1 // pred_fallthru
      _
    // Predicated region
    $region18: #{tpu_custom_call.1} parent=1 // pred_check
      _
    $region19: #{tpu_custom_call.1} parent=1 // pred_check_branch
      %61 = sbr.rel (0) target = $region21
    $region20: #{tpu_custom_call.1} parent=1 // pred_region
      _
    $region21: #{tpu_custom_call.1} parent=1 // pred_fallthru
      _
    // Predicated region
    $region22: #{tpu_custom_call.1} parent=1 // pred_check
      _
    $region23: #{tpu_custom_call.1} parent=1 // pred_check_branch
      %63 = sbr.rel (0) target = $region25
    $region24: #{tpu_custom_call.1} parent=1 // pred_region
      %s65 = ssub.s32 512, 512
      %66 = vsyncadd [#allocation9], %s65
      %s67 = sshll.u32 [#allocation10], 4
      %s68 = int_to_ptr.vmem [resolvable:$true] %s67
      %73 = dma.hbm_to_vmem [thread:$0]  %s5, 512, %s68, [#allocation9], 64, 64, 4
    $region25: #{tpu_custom_call.1} parent=1 // pred_fallthru
      _
    // Predicated region
    $region26: #{tpu_custom_call.1} parent=1 // pred_check
      _
    $region27: #{tpu_custom_call.1} parent=1 // pred_check_branch
      %75 = sbr.rel (0) target = $region29
    $region28: #{tpu_custom_call.1} parent=1 // pred_region
      _
    $region29: #{tpu_custom_call.1} parent=1 // pred_fallthru
      _
    // Predicated region
    $region30: #{tpu_custom_call.1} parent=1 // pred_check
      _
    $region31: #{tpu_custom_call.1} parent=1 // pred_check_branch
      %77 = sbr.rel (0) target = $region33
    $region32: #{tpu_custom_call.1} parent=1 // pred_region
      %78 = dma.done [#allocation3], 128
    $region33: #{tpu_custom_call.1} parent=1 // pred_fallthru
      _
    // Predicated region
    $region34: #{tpu_custom_call.1} parent=1 // pred_check
      _
    $region35: #{tpu_custom_call.1} parent=1 // pred_check_branch
      %80 = sbr.rel (0) target = $region37
    $region36: #{tpu_custom_call.1} parent=1 // pred_region
      %81 = dma.done [#allocation6], 128
    $region37: #{tpu_custom_call.1} parent=1 // pred_fallthru
      _
    // Predicated region
    $region38: #{tpu_custom_call.1} parent=1 // pred_check
      _
    $region39: #{tpu_custom_call.1} parent=1 // pred_check_branch
      %83 = sbr.rel (0) target = $region41
    $region40: #{tpu_custom_call.1} parent=1 // pred_region
      %84 = dma.done [#allocation6], 128
    $region41: #{tpu_custom_call.1} parent=1 // pred_fallthru
      _
    // Predicated region
    $region42: #{tpu_custom_call.1} parent=1 // pred_check
      _
    $region43: #{tpu_custom_call.1} parent=1 // pred_check_branch
      %86 = sbr.rel (0) target = $region45
    $region44: #{tpu_custom_call.1} parent=1 // pred_region
      %87 = dma.done [#allocation9], 256
    $region45: #{tpu_custom_call.1} parent=1 // pred_fallthru
      _
    // Predicated region
    $region46: #{tpu_custom_call.1} parent=1 // pred_check
      _
    $region47: #{tpu_custom_call.1} parent=1 // pred_check_branch
      %89 = sbr.rel (0) target = $region49
    $region48: #{tpu_custom_call.1} parent=1 // pred_region
      %90 = dma.done [#allocation9], 512
    $region49: #{tpu_custom_call.1} parent=1 // pred_fallthru
      _
    %v92 = vld [vmem:[#allocation2] sm:$0xff]
    %v93 = vpack.c.bf16 %v92, %v92
    %v94 = vld [vmem:[#allocation7] sm:$0xf]
    %v95 = vld [vmem:[#allocation7 + $0x4] sm:$0xf]
    %v96 = vld [vmem:[#allocation5] sm:$0xff]
    %v97 = vpack.c.bf16 %v96, %v96
    %v98 = vld [vmem:[#allocation8] sm:$0xf]
    %v99 = vld [vmem:[#allocation8 + $0x4] sm:$0xf]
    %v100 = vld [vmem:[#allocation8 + $0x8] sm:$0xf]
    %v101 = vld [vmem:[#allocation8 + $0xc] sm:$0xf]
    %v106 = vunpack.c.l.b16 %v98
    %v107 = vunpack.c.l.b16 %v99
    %v108 = vunpack.c.l.b16 %v100
    %v109 = vunpack.c.l.b16 %v101
    %v110 = vpack.c.b16 %v107, %v106
    %v111 = vpack.c.b16 %v109, %v108
    %vm114 = vcmask 261120
    %v116 = vsel %vm114, %v97, 0
    %118 = vmatprep.subr.bf16.mxu0 0
    %119 = vmatpush1.bf16.msra.mxu0 %v110
    %120 = vmatprep.subr.bf16.mxu0 0
    %121 = vmatpush1.bf16.msra.mxu0 %v111
    %122 = vmatprep.subr.bf16.mxu0 0
    %123 = vmatpush1.bf16.msra.mxu0 0
    %124 = vmatprep.subr.bf16.mxu0 0
    %125 = vmatpush1.bf16.msra.mxu0 0
    %126 = vmatprep.subr.bf16.mxu0 0
    %127 = vmatpush1.bf16.msra.mxu0 0
    %128 = vmatprep.subr.bf16.mxu0 0
    %129 = vmatpush1.bf16.msra.mxu0 0
    %130 = vmatprep.subr.bf16.mxu0 0
    %131 = vmatpush1.bf16.msra.mxu0 0
    %132 = vmatprep.subr.bf16.mxu0 0
    %133 = vmatpush1.bf16.msra.mxu0 0
    %134 = vmatprep.subr.bf16.mxu0 0
    %135 = vmatpush1.bf16.msra.mxu0 0
    %136 = vmatprep.subr.bf16.mxu0 0
    %137 = vmatpush1.bf16.msra.mxu0 0
    %138 = vmatprep.subr.bf16.mxu0 0
    %139 = vmatpush1.bf16.msra.mxu0 0
    %140 = vmatprep.subr.bf16.mxu0 0
    %141 = vmatpush1.bf16.msra.mxu0 0
    %142 = vmatprep.subr.bf16.mxu0 0
    %143 = vmatpush1.bf16.msra.mxu0 0
    %144 = vmatprep.subr.bf16.mxu0 0
    %145 = vmatpush1.bf16.msra.mxu0 0
    %146 = vmatprep.subr.bf16.mxu0 0
    %147 = vmatpush1.bf16.msra.mxu0 0
    %148 = vmatprep.subr.bf16.mxu0 0
    %149 = vmatpush1.bf16.msra.mxu0 0
    %150 = vmatprep.mubr.bf16.mxu0 0
    %151 = vmatmul.mubr.bf16.gmra.mrb[0].mxu0 %v116
    %v152 = vpop.f32.mrb[0].mxu0
    %v153 = vadd.f32 0.0, %v152
    %v154 = vpop.f32.mrb[0].mxu0
    %v155 = vpop.f32.mrb[0].mxu0
    %v156 = vpop.f32.mrb[0].mxu0
    %157 = vdwg.mxu0
    %v160 = vunpack.c.l.b16 %v94
    %v161 = vunpack.c.l.b16 %v95
    %v162 = vpack.c.b16 %v161, %v160
    %vm164 = vcmask 130048
    %v166 = vsel %vm164, %v93, 0
    %168 = vmatprep.subr.bf16.mxu0 0
    %169 = vmatpush1.bf16.msra.mxu0 %v162
    %170 = vmatprep.subr.bf16.mxu0 0
    %171 = vmatpush1.bf16.msra.mxu0 0
    %172 = vmatprep.subr.bf16.mxu0 0
    %173 = vmatpush1.bf16.msra.mxu0 0
    %174 = vmatprep.subr.bf16.mxu0 0
    %175 = vmatpush1.bf16.msra.mxu0 0
    %176 = vmatprep.subr.bf16.mxu0 0
    %177 = vmatpush1.bf16.msra.mxu0 0
    %178 = vmatprep.subr.bf16.mxu0 0
    %179 = vmatpush1.bf16.msra.mxu0 0
    %180 = vmatprep.subr.bf16.mxu0 0
    %181 = vmatpush1.bf16.msra.mxu0 0
    %182 = vmatprep.subr.bf16.mxu0 0
    %183 = vmatpush1.bf16.msra.mxu0 0
    %184 = vmatprep.subr.bf16.mxu0 0
    %185 = vmatpush1.bf16.msra.mxu0 0
    %186 = vmatprep.subr.bf16.mxu0 0
    %187 = vmatpush1.bf16.msra.mxu0 0
    %188 = vmatprep.subr.bf16.mxu0 0
    %189 = vmatpush1.bf16.msra.mxu0 0
    %190 = vmatprep.subr.bf16.mxu0 0
    %191 = vmatpush1.bf16.msra.mxu0 0
    %192 = vmatprep.subr.bf16.mxu0 0
    %193 = vmatpush1.bf16.msra.mxu0 0
    %194 = vmatprep.subr.bf16.mxu0 0
    %195 = vmatpush1.bf16.msra.mxu0 0
    %196 = vmatprep.subr.bf16.mxu0 0
    %197 = vmatpush1.bf16.msra.mxu0 0
    %198 = vmatprep.subr.bf16.mxu0 0
    %199 = vmatpush1.bf16.msra.mxu0 0
    %200 = vmatprep.mubr.bf16.mxu0 0
    %201 = vmatmul.mubr.bf16.gmra.mrb[0].mxu0 %v166
    %v202 = vpop.f32.mrb[0].mxu0
    %v203 = vadd.f32 %v153, %v202
    %v204 = vpop.f32.mrb[0].mxu0
    %v205 = vpop.f32.mrb[0].mxu0
    %v206 = vpop.f32.mrb[0].mxu0
    %207 = vdwg.mxu0
    %v208 = vld [vmem:[%s4] sm:$0x1]
    %v210 = vlaneseq
    %v211 = vshrl.u32 %v210, 7
    %v212 = vsub.s32 0, %v211
    %v213 = vrot.slane %v208, %v212
    %v215 = vadd.f32 %v203, %v213
    %v216 = vmax.f32 %v215, 0.0
    %v217 = vpack.c.bf16 %v216, %v216
    %v218 = vld [vmem:[#allocation10] sm:$0xf]
    %v219 = vld [vmem:[#allocation10 + $0x4] sm:$0xf]
    %v220 = vld [vmem:[#allocation10 + $0x8] sm:$0xf]
    %v221 = vld [vmem:[#allocation10 + $0xc] sm:$0xf]
    %v222 = vld [vmem:[#allocation10 + $0x10] sm:$0xf]
    %v223 = vld [vmem:[#allocation10 + $0x14] sm:$0xf]
    %v224 = vld [vmem:[#allocation10 + $0x18] sm:$0xf]
    %v225 = vld [vmem:[#allocation10 + $0x1c] sm:$0xf]
    %v226 = vld [vmem:[%s6] sm:$0x1]
    %v228 = vlaneseq
    %v229 = vshrl.u32 %v228, 7
    %v230 = vsub.s32 0, %v229
    %v231 = vrot.slane %v226, %v230
    %v241 = vunpack.c.l.b16 %v218
    %v242 = vunpack.c.l.b16 %v219
    %v243 = vunpack.c.l.b16 %v220
    %v244 = vunpack.c.l.b16 %v221
    %v245 = vunpack.c.l.b16 %v222
    %v246 = vunpack.c.l.b16 %v223
    %v247 = vunpack.c.l.b16 %v224
    %v248 = vunpack.c.l.b16 %v225
    %v249 = vpack.c.b16 %v242, %v241
    %v250 = vpack.c.b16 %v244, %v243
    %v251 = vpack.c.b16 %v246, %v245
    %v252 = vpack.c.b16 %v248, %v247
    %vm257 = vcmask 523264
    %v259 = vsel %vm257, %v217, 0
    %261 = vmatprep.subr.bf16.mxu0 0
    %262 = vmatpush1.bf16.msra.mxu0 %v249
    %263 = vmatprep.subr.bf16.mxu0 0
    %264 = vmatpush1.bf16.msra.mxu0 %v250
    %265 = vmatprep.subr.bf16.mxu0 0
    %266 = vmatpush1.bf16.msra.mxu0 %v251
    %267 = vmatprep.subr.bf16.mxu0 0
    %268 = vmatpush1.bf16.msra.mxu0 %v252
    %269 = vmatprep.subr.bf16.mxu0 0
    %270 = vmatpush1.bf16.msra.mxu0 0
    %271 = vmatprep.subr.bf16.mxu0 0
    %272 = vmatpush1.bf16.msra.mxu0 0
    %273 = vmatprep.subr.bf16.mxu0 0
    %274 = vmatpush1.bf16.msra.mxu0 0
    %275 = vmatprep.subr.bf16.mxu0 0
    %276 = vmatpush1.bf16.msra.mxu0 0
    %277 = vmatprep.subr.bf16.mxu0 0
    %278 = vmatpush1.bf16.msra.mxu0 0
    %279 = vmatprep.subr.bf16.mxu0 0
    %280 = vmatpush1.bf16.msra.mxu0 0
    %281 = vmatprep.subr.bf16.mxu0 0
    %282 = vmatpush1.bf16.msra.mxu0 0
    %283 = vmatprep.subr.bf16.mxu0 0
    %284 = vmatpush1.bf16.msra.mxu0 0
    %285 = vmatprep.subr.bf16.mxu0 0
    %286 = vmatpush1.bf16.msra.mxu0 0
    %287 = vmatprep.subr.bf16.mxu0 0
    %288 = vmatpush1.bf16.msra.mxu0 0
    %289 = vmatprep.subr.bf16.mxu0 0
    %290 = vmatpush1.bf16.msra.mxu0 0
    %291 = vmatprep.subr.bf16.mxu0 0
    %292 = vmatpush1.bf16.msra.mxu0 0
    %293 = vmatprep.mubr.bf16.mxu0 0
    %294 = vmatmul.mubr.bf16.gmra.mrb[0].mxu0 %v259
    %v295 = vpop.f32.mrb[0].mxu0
    %v296 = vadd.f32 %v231, %v295
    %v297 = vpop.f32.mrb[0].mxu0
    %v298 = vpop.f32.mrb[0].mxu0
    %v299 = vpop.f32.mrb[0].mxu0
    %300 = vdwg.mxu0
    %301 = vst [vmem:[#allocation11] sm:$0xff] %v296
    // Predicated region
    $region50: #{tpu_custom_call.1} parent=1 // pred_check
      _
    $region51: #{tpu_custom_call.1} parent=1 // pred_check_branch
      %303 = sbr.rel (0) target = $region53
    $region52: #{tpu_custom_call.1} parent=1 // pred_region
      %s305 = ssub.s32 128, 128
      %306 = vsyncadd [#allocation4], %s305
      %s308 = sshll.u32 [#allocation11], 4
      %s309 = int_to_ptr.vmem [resolvable:$true] %s308
      %311 = dma.vmem_to_hbm [thread:$0]  %s309, 128, %s7, [#allocation4]
    $region53: #{tpu_custom_call.1} parent=1 // pred_fallthru
      _
    // Predicated region
    $region54: #{tpu_custom_call.1} parent=1 // pred_check
      _
    $region55: #{tpu_custom_call.1} parent=1 // pred_check_branch
      %313 = sbr.rel (0) target = $region57
    $region56: #{tpu_custom_call.1} parent=1 // pred_region
      %314 = dma.done [#allocation4], 128
    $region57: #{tpu_custom_call.1} parent=1 // pred_fallthru
      _
    %315 = vsyncpa [#allocation3], 1
    %316 = vsyncpa [#allocation6], 1
    %317 = vsyncpa [#allocation9], 1
    %318 = vsyncpa [#allocation4], 1

</llo_original>
